<compile_context>
chip_gen: v6e
topology: v6e:2x2x1
jax: 0.10.0
libtpu: 0.0.40
codegen_flags: <defaults>
</compile_context>

<pallas_src>
import jax
import jax.numpy as jnp
from jax import lax
from jax.experimental import pallas as pl
from jax.experimental.pallas import tpu as pltpu

KH = KW = 3
GROUPS = 2
CIN = 8
COUT = 8
CIN_G = CIN // GROUPS    # 4
COUT_G = COUT // GROUPS  # 4
NTAPS = KH * KW          # 9


def _make_kernel(H, W, b_tile):
    HW = H * W
    # Lane-aligned zero pad of the flat spatial axis; >= W+1 covers every tap
    # shift s = dh*W + dw in [-(W+1), W+1].
    LPAD = ((W + 1 + 127) // 128) * 128

    def kernel(x_ref, w_ref, b_ref, o_ref):
        # x_ref: (b_tile, CIN, HW)   lane-dense flat-spatial input (unpadded)
        # w_ref: (COUT, NTAPS*CIN)   block-diagonal weights, tap-major columns
        # b_ref: (COUT, 1)
        # o_ref: (b_tile, COUT, HW)  lane-dense output (NCHW after reshape)
        w = w_ref[...]
        bvec = b_ref[...]

        # Source-coordinate column-wrap masks (hoisted out of the batch loop).
        col = jax.lax.broadcasted_iota(jnp.int32, (CIN, HW), 1) % W
        not_last_col = col != (W - 1)     # zero these sources for dw = -1 taps
        not_first_col = col != 0          # zero these sources for dw = +1 taps

        zpad = jnp.zeros((CIN, LPAD), x_ref.dtype)

        for b in range(b_tile):           # static unrolled loop over the batch tile
            x_b = x_ref[b]                                     # (CIN, HW)
            x_l = jnp.where(not_last_col, x_b, 0)              # for all dw = -1 taps
            x_r = jnp.where(not_first_col, x_b, 0)             # for all dw = +1 taps

            # Zero-extend the flat spatial axis (lane-aligned concats). Row
            # out-of-range tap reads land in these zeros -> 'same' padding,
            # fused in-kernel.
            xp = (jnp.concatenate([zpad, x_l, zpad], axis=1),  # dw = -1
                  jnp.concatenate([zpad, x_b, zpad], axis=1),  # dw =  0
                  jnp.concatenate([zpad, x_r, zpad], axis=1))  # dw = +1

            # im2col slab as a register value: one lane-dense (CIN, HW) piece
            # per tap, stacked along rows -> (NTAPS*CIN, HW).
            pieces = []
            for kh in range(KH):
                for kw in range(KW):
                    s = (kh - 1) * W + (kw - 1)
                    src = xp[kw]
                    pieces.append(src[:, LPAD + s:LPAD + s + HW])
            col_slab = jnp.concatenate(pieces, axis=0)         # (72, HW)

            # Single fused contraction on the MXU: (8, 72) @ (72, HW).
            acc = jnp.dot(w, col_slab, preferred_element_type=jnp.float32)
            acc = acc + bvec                                   # lane broadcast
            o_ref[b] = acc.astype(o_ref.dtype)                 # full unmasked vst

    return kernel


def grouped_conv2d_same(x_nchw, weight, bias, *, b_tile=None):
    """x_nchw: (N, 8, H, W); weight: (8, 4, 3, 3) [PyTorch OIHW]; bias: (8,)."""
    N, C, H, W = x_nchw.shape
    assert C == CIN
    HW = H * W

    if b_tile is None:
        # Keep >= 2 grid steps (v7x has 2 TensorCores) while amortizing the
        # per-step pipeline overhead over several batch elements.
        b_tile = max(1, N // 2)
    # VMEM budget (v7x: 64 MiB physical / 32 MiB scoped is the tightest):
    # keep the double-buffered in+out tiles per step comfortably small.
    itemsize = jnp.dtype(x_nchw.dtype).itemsize
    per_batch_bytes = (CIN + COUT) * HW * itemsize
    b_tile = min(b_tile, max(1, (4 << 20) // per_batch_bytes))
    while N % b_tile:
        b_tile -= 1

    # Lane-dense flat-spatial input: pure reshape, no extra HBM pass.
    x_flat = x_nchw.reshape(N, CIN, HW)

    # Grouped weights -> dense block-diagonal (COUT, NTAPS*CIN), tap-major cols.
    w_full = jnp.zeros((COUT, CIN, KH, KW), weight.dtype)
    w_full = w_full.at[:COUT_G, :CIN_G].set(weight[:COUT_G])
    w_full = w_full.at[COUT_G:, CIN_G:].set(weight[COUT_G:])
    w_bd = jnp.transpose(w_full, (0, 2, 3, 1)).reshape(COUT, NTAPS * CIN)
    b2 = bias.reshape(COUT, 1)

    out = pl.pallas_call(
        _make_kernel(H, W, b_tile),
        out_shape=jax.ShapeDtypeStruct((N, COUT, HW), x_nchw.dtype),
        grid_spec=pltpu.PrefetchScalarGridSpec(
            num_scalar_prefetch=0,
            grid=(N // b_tile,),
            in_specs=[
                pl.BlockSpec((b_tile, CIN, HW), lambda n: (n, 0, 0)),
                pl.BlockSpec((COUT, NTAPS * CIN), lambda n: (0, 0)),
                pl.BlockSpec((COUT, 1), lambda n: (0, 0)),
            ],
            out_specs=pl.BlockSpec((b_tile, COUT, HW), lambda n: (n, 0, 0)),
        ),
        compiler_params=pltpu.CompilerParams(
            dimension_semantics=("parallel",)),
    )(x_flat, w_bd, b2)

    # (N, COUT, H*W) -> NCHW: pure reshape, no transpose.
    return out.reshape(N, COUT, H, W)


if __name__ == "__main__":
    key = jax.random.PRNGKey(0)
    k_x, k_w, k_b = jax.random.split(key, 3)

    # Small shapes consistent with the module (channels fixed at 8 by the conv).
    N, H, W = 4, 16, 16
    x = jax.random.normal(k_x, (N, CIN, H, W), dtype=jnp.float32)

    # Deterministic parameter init (PyTorch-style uniform bound 1/sqrt(fan_in)).
    fan_in = CIN_G * KH * KW
    bound = 1.0 / (fan_in ** 0.5)
    weight = jax.random.uniform(k_w, (COUT, CIN_G, KH, KW),
                                minval=-bound, maxval=bound, dtype=jnp.float32)
    bias = jax.random.uniform(k_b, (COUT,),
                              minval=-bound, maxval=bound, dtype=jnp.float32)

    y = grouped_conv2d_same(x, weight, bias)
    y = jax.block_until_ready(y)

    # Reference check with XLA's grouped conv (NCHW, feature_group_count=2).
    y_ref = lax.conv_general_dilated(
        x, weight, window_strides=(1, 1), padding="SAME",
        dimension_numbers=("NCHW", "OIHW", "NCHW"),
        feature_group_count=GROUPS,
    ) + bias[None, :, None, None]

    assert y.shape == (N, COUT, H, W)
    assert jnp.allclose(y, y_ref, atol=1e-4, rtol=1e-4)
    print("KERNEL_OK")
</pallas_src>

<mosaic_0001>
module attributes {stable_mosaic.version = 11 : i64} {
  func.func @kernel(%arg0: i32, %arg1: memref<2x8x256xf32, #tpu.memory_space<vmem>>, %arg2: memref<8x72xf32, #tpu.memory_space<vmem>>, %arg3: memref<8x1xf32, #tpu.memory_space<vmem>>, %arg4: memref<2x8x256xf32, #tpu.memory_space<vmem>>) attributes {dimension_semantics = [#tpu.dimension_semantics<parallel>], iteration_bounds = array<i64: 2>, scalar_prefetch = 0 : i64, scratch_operands = 0 : i64, tpu.core_type = #tpu.core_type<tc>, window_params = [{transform_indices = @transform_0, window_bounds = array<i64: 2, 8, 256>}, {pipeline_mode = #tpu.pipeline_mode<synchronous>, transform_indices = @transform_1, window_bounds = array<i64: 8, 72>}, {pipeline_mode = #tpu.pipeline_mode<synchronous>, transform_indices = @transform_2, window_bounds = array<i64: 8, 1>}, {transform_indices = @transform_3, window_bounds = array<i64: 2, 8, 256>}]} {
    %c0 = arith.constant 0 : index
    %c0_0 = arith.constant 0 : index
    %0 = vector.load %arg2[%c0, %c0_0] : memref<8x72xf32, #tpu.memory_space<vmem>>, vector<8x72xf32>
    %c0_1 = arith.constant 0 : index
    %c0_2 = arith.constant 0 : index
    %1 = vector.load %arg3[%c0_1, %c0_2] : memref<8x1xf32, #tpu.memory_space<vmem>>, vector<8x1xf32>
    %2 = tpu.iota {dimensions = array<i32: 1>} : vector<8x256xi32>
    %c16_i32 = arith.constant 16 : i32
    %c0_i32 = arith.constant 0 : i32
    %3 = arith.cmpi eq, %c16_i32, %c0_i32 : i32
    %c1_i32 = arith.constant 1 : i32
    %4 = arith.select %3, %c1_i32, %c16_i32 : i32
    %5 = vector.broadcast %4 : i32 to vector<8x256xi32>
    %6 = arith.remsi %2, %5 : vector<8x256xi32>
    %c0_i32_3 = arith.constant 0 : i32
    %7 = vector.broadcast %c0_i32_3 : i32 to vector<8x256xi32>
    %8 = arith.cmpi ne, %6, %7 : vector<8x256xi32>
    %c0_i32_4 = arith.constant 0 : i32
    %9 = vector.broadcast %c0_i32_4 : i32 to vector<8x256xi32>
    %10 = arith.cmpi slt, %6, %9 : vector<8x256xi32>
    %c0_i32_5 = arith.constant 0 : i32
    %11 = arith.cmpi slt, %4, %c0_i32_5 : i32
    %12 = vector.broadcast %11 : i1 to vector<8x256xi1>
    %13 = vector.broadcast %12 : vector<8x256xi1> to vector<8x256xi1>
    %14 = arith.xori %10, %13 : vector<8x256xi1>
    %15 = arith.andi %14, %8 : vector<8x256xi1>
    %16 = vector.broadcast %4 : i32 to vector<8x256xi32>
    %17 = arith.addi %6, %16 : vector<8x256xi32>
    %18 = arith.select %15, %17, %6 : vector<8x256xi1>, vector<8x256xi32>
    %c15_i32 = arith.constant 15 : i32
    %19 = vector.broadcast %c15_i32 : i32 to vector<8x256xi32>
    %20 = arith.cmpi ne, %18, %19 : vector<8x256xi32>
    %c0_i32_6 = arith.constant 0 : i32
    %21 = vector.broadcast %c0_i32_6 : i32 to vector<8x256xi32>
    %22 = arith.cmpi ne, %18, %21 : vector<8x256xi32>
    %cst = arith.constant 0.000000e+00 : f32
    %23 = vector.broadcast %cst : f32 to vector<8x128xf32>
    %c0_7 = arith.constant 0 : index
    %c0_8 = arith.constant 0 : index
    %c0_9 = arith.constant 0 : index
    %24 = vector.load %arg1[%c0_7, %c0_8, %c0_9] : memref<2x8x256xf32, #tpu.memory_space<vmem>>, vector<1x8x256xf32>
    %25 = vector.shape_cast %24 : vector<1x8x256xf32> to vector<8x256xf32>
    %c0_i32_10 = arith.constant 0 : i32
    %26 = arith.sitofp %c0_i32_10 : i32 to f32
    %27 = vector.broadcast %26 : f32 to vector<8x256xf32>
    %28 = arith.select %20, %25, %27 : vector<8x256xi1>, vector<8x256xf32>
    %c0_i32_11 = arith.constant 0 : i32
    %29 = arith.sitofp %c0_i32_11 : i32 to f32
    %30 = vector.broadcast %29 : f32 to vector<8x256xf32>
    %31 = arith.select %22, %25, %30 : vector<8x256xi1>, vector<8x256xf32>
    %32 = tpu.concatenate %23, %28, %23 in 1 : vector<8x128xf32>, vector<8x256xf32>, vector<8x128xf32> -> vector<8x512xf32>
    %33 = tpu.concatenate %23, %25, %23 in 1 : vector<8x128xf32>, vector<8x256xf32>, vector<8x128xf32> -> vector<8x512xf32>
    %34 = tpu.concatenate %23, %31, %23 in 1 : vector<8x128xf32>, vector<8x256xf32>, vector<8x128xf32> -> vector<8x512xf32>
    %35 = vector.extract_strided_slice %32 {offsets = [0, 111], sizes = [8, 256], strides = [1, 1]} : vector<8x512xf32> to vector<8x256xf32>
    %36 = vector.extract_strided_slice %33 {offsets = [0, 112], sizes = [8, 256], strides = [1, 1]} : vector<8x512xf32> to vector<8x256xf32>
    %37 = vector.extract_strided_slice %34 {offsets = [0, 113], sizes = [8, 256], strides = [1, 1]} : vector<8x512xf32> to vector<8x256xf32>
    %38 = vector.extract_strided_slice %32 {offsets = [0, 127], sizes = [8, 256], strides = [1, 1]} : vector<8x512xf32> to vector<8x256xf32>
    %39 = vector.extract_strided_slice %33 {offsets = [0, 128], sizes = [8, 256], strides = [1, 1]} : vector<8x512xf32> to vector<8x256xf32>
    %40 = vector.extract_strided_slice %34 {offsets = [0, 129], sizes = [8, 256], strides = [1, 1]} : vector<8x512xf32> to vector<8x256xf32>
    %41 = vector.extract_strided_slice %32 {offsets = [0, 143], sizes = [8, 256], strides = [1, 1]} : vector<8x512xf32> to vector<8x256xf32>
    %42 = vector.extract_strided_slice %33 {offsets = [0, 144], sizes = [8, 256], strides = [1, 1]} : vector<8x512xf32> to vector<8x256xf32>
    %43 = vector.extract_strided_slice %34 {offsets = [0, 145], sizes = [8, 256], strides = [1, 1]} : vector<8x512xf32> to vector<8x256xf32>
    %44 = tpu.concatenate %35, %36, %37, %38, %39, %40, %41, %42, %43 in 0 : vector<8x256xf32>, vector<8x256xf32>, vector<8x256xf32>, vector<8x256xf32>, vector<8x256xf32>, vector<8x256xf32>, vector<8x256xf32>, vector<8x256xf32>, vector<8x256xf32> -> vector<72x256xf32>
    %cst_12 = arith.constant dense<0.000000e+00> : vector<8x256xf32>
    %45 = tpu.matmul %0, %44, %cst_12 {dimension_numbers = #tpu.dot_dimension_numbers<[1], [0], [0], [1], [0, 0, 1, 1], [], []>} : vector<8x72xf32>, vector<72x256xf32>, vector<8x256xf32> -> vector<8x256xf32>
    %46 = vector.broadcast %1 : vector<8x1xf32> to vector<8x256xf32>
    %47 = arith.addf %45, %46 : vector<8x256xf32>
    %c0_13 = arith.constant 0 : index
    %c0_14 = arith.constant 0 : index
    %c0_15 = arith.constant 0 : index
    %48 = vector.load %arg4[%c0_13, %c0_14, %c0_15] : memref<2x8x256xf32, #tpu.memory_space<vmem>>, vector<1x8x256xf32>
    %49 = vector.shape_cast %48 : vector<1x8x256xf32> to vector<8x256xf32>
    %50 = vector.shape_cast %47 : vector<8x256xf32> to vector<1x8x256xf32>
    tpu.vector_store %arg4[%c0_13, %c0_14, %c0_15], %50 {strides = array<i32>} : memref<2x8x256xf32, #tpu.memory_space<vmem>>, vector<1x8x256xf32>,
    %c1 = arith.constant 1 : index
    %c0_16 = arith.constant 0 : index
    %c0_17 = arith.constant 0 : index
    %51 = vector.load %arg1[%c1, %c0_16, %c0_17] : memref<2x8x256xf32, #tpu.memory_space<vmem>>, vector<1x8x256xf32>
    %52 = vector.shape_cast %51 : vector<1x8x256xf32> to vector<8x256xf32>
    %c0_i32_18 = arith.constant 0 : i32
    %53 = arith.sitofp %c0_i32_18 : i32 to f32
    %54 = vector.broadcast %53 : f32 to vector<8x256xf32>
    %55 = arith.select %20, %52, %54 : vector<8x256xi1>, vector<8x256xf32>
    %c0_i32_19 = arith.constant 0 : i32
    %56 = arith.sitofp %c0_i32_19 : i32 to f32
    %57 = vector.broadcast %56 : f32 to vector<8x256xf32>
    %58 = arith.select %22, %52, %57 : vector<8x256xi1>, vector<8x256xf32>
    %59 = tpu.concatenate %23, %55, %23 in 1 : vector<8x128xf32>, vector<8x256xf32>, vector<8x128xf32> -> vector<8x512xf32>
    %60 = tpu.concatenate %23, %52, %23 in 1 : vector<8x128xf32>, vector<8x256xf32>, vector<8x128xf32> -> vector<8x512xf32>
    %61 = tpu.concatenate %23, %58, %23 in 1 : vector<8x128xf32>, vector<8x256xf32>, vector<8x128xf32> -> vector<8x512xf32>
    %62 = vector.extract_strided_slice %59 {offsets = [0, 111], sizes = [8, 256], strides = [1, 1]} : vector<8x512xf32> to vector<8x256xf32>
    %63 = vector.extract_strided_slice %60 {offsets = [0, 112], sizes = [8, 256], strides = [1, 1]} : vector<8x512xf32> to vector<8x256xf32>
    %64 = vector.extract_strided_slice %61 {offsets = [0, 113], sizes = [8, 256], strides = [1, 1]} : vector<8x512xf32> to vector<8x256xf32>
    %65 = vector.extract_strided_slice %59 {offsets = [0, 127], sizes = [8, 256], strides = [1, 1]} : vector<8x512xf32> to vector<8x256xf32>
    %66 = vector.extract_strided_slice %60 {offsets = [0, 128], sizes = [8, 256], strides = [1, 1]} : vector<8x512xf32> to vector<8x256xf32>
    %67 = vector.extract_strided_slice %61 {offsets = [0, 129], sizes = [8, 256], strides = [1, 1]} : vector<8x512xf32> to vector<8x256xf32>
    %68 = vector.extract_strided_slice %59 {offsets = [0, 143], sizes = [8, 256], strides = [1, 1]} : vector<8x512xf32> to vector<8x256xf32>
    %69 = vector.extract_strided_slice %60 {offsets = [0, 144], sizes = [8, 256], strides = [1, 1]} : vector<8x512xf32> to vector<8x256xf32>
    %70 = vector.extract_strided_slice %61 {offsets = [0, 145], sizes = [8, 256], strides = [1, 1]} : vector<8x512xf32> to vector<8x256xf32>
    %71 = tpu.concatenate %62, %63, %64, %65, %66, %67, %68, %69, %70 in 0 : vector<8x256xf32>, vector<8x256xf32>, vector<8x256xf32>, vector<8x256xf32>, vector<8x256xf32>, vector<8x256xf32>, vector<8x256xf32>, vector<8x256xf32>, vector<8x256xf32> -> vector<72x256xf32>
    %cst_20 = arith.constant dense<0.000000e+00> : vector<8x256xf32>
    %72 = tpu.matmul %0, %71, %cst_20 {dimension_numbers = #tpu.dot_dimension_numbers<[1], [0], [0], [1], [0, 0, 1, 1], [], []>} : vector<8x72xf32>, vector<72x256xf32>, vector<8x256xf32> -> vector<8x256xf32>
    %73 = vector.broadcast %1 : vector<8x1xf32> to vector<8x256xf32>
    %74 = arith.addf %72, %73 : vector<8x256xf32>
    %c1_21 = arith.constant 1 : index
    %c0_22 = arith.constant 0 : index
    %c0_23 = arith.constant 0 : index
    %75 = vector.load %arg4[%c1_21, %c0_22, %c0_23] : memref<2x8x256xf32, #tpu.memory_space<vmem>>, vector<1x8x256xf32>
    %76 = vector.shape_cast %75 : vector<1x8x256xf32> to vector<8x256xf32>
    %77 = vector.shape_cast %74 : vector<8x256xf32> to vector<1x8x256xf32>
    tpu.vector_store %arg4[%c1_21, %c0_22, %c0_23], %77 {strides = array<i32>} : memref<2x8x256xf32, #tpu.memory_space<vmem>>, vector<1x8x256xf32>,
    return
  }
  func.func @transform_0(%arg0: i32) -> (i32, i32, i32) {
    %c0_i32 = arith.constant 0 : i32
    %c0_i32_0 = arith.constant 0 : i32
    %c0_i32_1 = arith.constant 0 : i32
    return %arg0, %c0_i32, %c0_i32_0 : i32, i32, i32
  }
  func.func @transform_1(%arg0: i32) -> (i32, i32) {
    %c0_i32 = arith.constant 0 : i32
    %c0_i32_0 = arith.constant 0 : i32
    %c0_i32_1 = arith.constant 0 : i32
    return %c0_i32, %c0_i32_0 : i32, i32
  }
  func.func @transform_2(%arg0: i32) -> (i32, i32) {
    %c0_i32 = arith.constant 0 : i32
    %c0_i32_0 = arith.constant 0 : i32
    %c0_i32_1 = arith.constant 0 : i32
    return %c0_i32, %c0_i32_0 : i32, i32
  }
  func.func @transform_3(%arg0: i32) -> (i32, i32, i32) {
    %c0_i32 = arith.constant 0 : i32
    %c0_i32_0 = arith.constant 0 : i32
    %c0_i32_1 = arith.constant 0 : i32
    return %arg0, %c0_i32, %c0_i32_0 : i32, i32, i32
  }
}

</mosaic_0001>

<llo_original>
// kernel: tpu_custom_call.1
$region0: #{tpu_custom_call.1}
  #allocation0 [shape = 'u32[]', space=smem, size = 0x4, offset = 0x4, fixed_abs, tag = 'smem constant byte address 0x4 - core index']
  #allocation1 [shape = 'u32[144,128]{1,0:T(1,128)}', space=vmem, size = 0x12000, scoped, tag = 'internal scratch']
  %s0 = inlined_call_operand.hbm [shape: f32[4,8,256], index: 0, kind: input, shape index: {}]
  %s1 = inlined_call_operand.vmem [shape: f32[8,72], index: 1, kind: input, shape index: {}]
  %s2 = inlined_call_operand.vmem [shape: f32[8,1], index: 2, kind: input, shape index: {}]
  %s3 = inlined_call_operand.hbm [shape: f32[4,8,256], index: 3, kind: output, shape index: {}]
  %s4 = sld [smem:[#allocation0]]
  $region49: #{tpu_custom_call.1} parent=0
    _
  %s6 = ssub.s32 1, %s4
  %s7 = scalar_select 0, %s6, %s4
  $region1: #{tpu_custom_call.1} parent=0
    #allocation2 [shape = 'u8[32768]{0}', space=vmem, size = 0x8000, scoped, tag = 'input window, operand 0']
    #allocation3 [shape = 's32[2]{0}', space=sflag, size = 0x8, scoped, tag = 'scoped memory for tpu_custom_call.1']
    #allocation4 [shape = 's32[2]{0}', space=sflag, size = 0x8, scoped, tag = 'scoped memory for tpu_custom_call.1']
    #allocation5 [shape = 'u8[32768]{0}', space=vmem, size = 0x8000, scoped, tag = 'output window, operand 0']
    %8 = vsyncpa [#allocation3], 0
    %s9 = scalar_lea.sflag [#allocation3], 1
    %10 = vsyncpa %s9, 0
    %11 = vsyncpa [#allocation4], 0
    %s12 = scalar_lea.sflag [#allocation4], 1
    %13 = vsyncpa %s12, 0
    loop: start=0, step=1, limit=4
    $region2: #{tpu_custom_call.1} parent=1 // loop_pre_header
      _
    $region3: #{tpu_custom_call.1} parent=1 // loop_header
      %s15 = sphi 0, %s19
      %p16 = scmp.ge.s32.totalorder %s15, 4
      %s25 = sphi 0, %s27
      %s28 = sphi 0, %s25
      %s29 = sphi 0, %s28
      %s45 = sphi 0, %s29
      %s49 = sphi 0, %s49
      %s51 = sphi 0, %s49
      %s52 = sphi 0, %s51
      %s66 = sphi 0, %s52
      %s70 = sphi 0, %s70
      %s72 = sphi 0, %s70
      %s73 = sphi 0, %s72
      %s87 = sphi 0, %s73
      %s93 = sphi 0, %s95
      %s96 = sphi 0, %s93
      %s97 = sphi 0, %s96
      %s113 = sphi 0, %s97
    $region4: #{tpu_custom_call.1} parent=1 // loop_header_branch
      %18 = sbr.rel (%p16) target = $region8
    $region5: #{tpu_custom_call.1} parent=1 // loop_body
      %s20 = ssub.s32 %s15, 1
      %s21 = ssub.s32 %s15, 2
      %s22 = sadd.s32 %s15, 1
      %s23 = ssub.s32 %s15, %s22
      %p24 = scmp.eq.s32.totalorder %s23, 0
      %s26 = sadd.s32 %s25, 1
      %s27 = scalar_select %p24, %s25, %s26
      %p30 = pneg %p24
      %p31 = scmp.eq.s32.totalorder %s15, 1
      %p32 = por %p30, %p31
      %p33 = scmp.ne.s32.totalorder %s25, %s28
      %p34 = scmp.eq.s32.totalorder %s15, 0
      %p35 = por %p33, %p34
      %p36 = scmp.ne.s32.totalorder %s25, %s28
      %p37 = scmp.eq.s32.totalorder %s20, 1
      %p38 = por %p36, %p37
      %p39 = scmp.ne.s32.totalorder %s28, %s29
      %p40 = scmp.eq.s32.totalorder %s20, 0
      %p41 = por %p39, %p40
      %p42 = scmp.ne.s32.totalorder %s28, %s29
      %p43 = scmp.eq.s32.totalorder %s21, 1
      %p44 = por %p42, %p43
      %p46 = scmp.ne.s32.totalorder %s29, %s45
      %p47 = scmp.eq.s32.totalorder %s21, 0
      %p48 = por %p46, %p47
      %s50 = sadd.s32 %s49, 1
      %p53 = scmp.eq.s32.totalorder %s15, 1
      %p54 = scmp.ne.s32.totalorder %s49, %s51
      %p55 = scmp.eq.s32.totalorder %s15, 0
      %p56 = por %p54, %p55
      %p57 = scmp.ne.s32.totalorder %s49, %s51
      %p58 = scmp.eq.s32.totalorder %s20, 1
      %p59 = por %p57, %p58
      %p60 = scmp.ne.s32.totalorder %s51, %s52
      %p61 = scmp.eq.s32.totalorder %s20, 0
      %p62 = por %p60, %p61
      %p63 = scmp.ne.s32.totalorder %s51, %s52
      %p64 = scmp.eq.s32.totalorder %s21, 1
      %p65 = por %p63, %p64
      %p67 = scmp.ne.s32.totalorder %s52, %s66
      %p68 = scmp.eq.s32.totalorder %s21, 0
      %p69 = por %p67, %p68
      %s71 = sadd.s32 %s70, 1
      %p74 = scmp.eq.s32.totalorder %s15, 1
      %p75 = scmp.ne.s32.totalorder %s70, %s72
      %p76 = scmp.eq.s32.totalorder %s15, 0
      %p77 = por %p75, %p76
      %p78 = scmp.ne.s32.totalorder %s70, %s72
      %p79 = scmp.eq.s32.totalorder %s20, 1
      %p80 = por %p78, %p79
      %p81 = scmp.ne.s32.totalorder %s72, %s73
      %p82 = scmp.eq.s32.totalorder %s20, 0
      %p83 = por %p81, %p82
      %p84 = scmp.ne.s32.totalorder %s72, %s73
      %p85 = scmp.eq.s32.totalorder %s21, 1
      %p86 = por %p84, %p85
      %p88 = scmp.ne.s32.totalorder %s73, %s87
      %p89 = scmp.eq.s32.totalorder %s21, 0
      %p90 = por %p88, %p89
      %s91 = ssub.s32 %s15, %s22
      %p92 = scmp.eq.s32.totalorder %s91, 0
      %s94 = sadd.s32 %s93, 1
      %s95 = scalar_select %p92, %s93, %s94
      %p98 = pneg %p92
      %p99 = scmp.eq.s32.totalorder %s15, 1
      %p100 = por %p98, %p99
      %p101 = scmp.ne.s32.totalorder %s93, %s96
      %p102 = scmp.eq.s32.totalorder %s15, 0
      %p103 = por %p101, %p102
      %p104 = scmp.ne.s32.totalorder %s93, %s96
      %p105 = scmp.eq.s32.totalorder %s20, 1
      %p106 = por %p104, %p105
      %p107 = scmp.ne.s32.totalorder %s96, %s97
      %p108 = scmp.eq.s32.totalorder %s20, 0
      %p109 = por %p107, %p108
      %p110 = scmp.ne.s32.totalorder %s96, %s97
      %p111 = scmp.eq.s32.totalorder %s21, 1
      %p112 = por %p110, %p111
      %p114 = scmp.ne.s32.totalorder %s97, %s113
      %p115 = scmp.eq.s32.totalorder %s21, 0
      %p116 = por %p114, %p115
      %p117 = scmp.le.s32.totalorder 1, %s15
      %p118 = scmp.lt.s32.totalorder %s15, 3
      %p119 = pnand %p117, %p118
      %p120 = pneg %p119
      // Predicated region
      $region9: #{tpu_custom_call.1} parent=5 // pred_check
        _
      $region10: #{tpu_custom_call.1} parent=5 // pred_check_branch
        %122 = sbr.rel (%p119) target = $region12
      $region11: #{tpu_custom_call.1} parent=5 // pred_region
        %s123 = ssub.s32 %s15, 1
        // Predicated region
        $region13: #{tpu_custom_call.1} parent=11 // pred_check
          %p124 = pneg %p62
        $region14: #{tpu_custom_call.1} parent=11 // pred_check_branch
          %126 = sbr.rel (%p124) target = $region16
        $region15: #{tpu_custom_call.1} parent=11 // pred_region
          _
        $region16: #{tpu_custom_call.1} parent=11 // pred_fallthru
          _
        // Predicated region
        $region17: #{tpu_custom_call.1} parent=11 // pred_check
          %p127 = pneg %p83
        $region18: #{tpu_custom_call.1} parent=11 // pred_check_branch
          %129 = sbr.rel (%p127) target = $region20
        $region19: #{tpu_custom_call.1} parent=11 // pred_region
          _
        $region20: #{tpu_custom_call.1} parent=11 // pred_fallthru
          _
      $region12: #{tpu_custom_call.1} parent=5 // pred_fallthru
        _
      %p130 = scmp.lt.s32.totalorder %s15, 2
      // Predicated region
      $region21: #{tpu_custom_call.1} parent=5 // pred_check
        %p131 = pneg %p130
      $region22: #{tpu_custom_call.1} parent=5 // pred_check_branch
        %133 = sbr.rel (%p131) target = $region24
      $region23: #{tpu_custom_call.1} parent=5 // pred_region
        // Predicated region
        $region25: #{tpu_custom_call.1} parent=23 // pred_check
          %p134 = pneg %p35
        $region26: #{tpu_custom_call.1} parent=23 // pred_check_branch
          %136 = sbr.rel (%p134) target = $region28
        $region27: #{tpu_custom_call.1} parent=23 // pred_region
          %s137 = sand.u32 %s25, 1
          %s138 = scalar_lea.sflag [#allocation3], %s137
          %s139 = sand.u32 %s25, 1
          %s140 = smul.addr %s139, 32
          %s141 = scalar_lea.vmem [#allocation2], %s140
          %s142 = smul.u32 2, %s15
          %s144 = ssub.s32 512, 512
          %145 = vsyncadd %s138, %s144
          %s146 = smul.addr %s142, 2
          %s147 = smul.addr %s146, 128
          %s148 = scalar_lea.hbm %s0, %s147
          %s149 = sshll.u32 %s141, 4
          %s150 = int_to_ptr.vmem [resolvable:$true] %s149
          %155 = dma.hbm_to_vmem [thread:$0]  %s148, 512, %s150, %s138, 256, 256, 16
        $region28: #{tpu_custom_call.1} parent=23 // pred_fallthru
          _
      $region24: #{tpu_custom_call.1} parent=5 // pred_fallthru
        _
      %p156 = scmp.le.s32.totalorder 1, %s15
      %p157 = scmp.lt.s32.totalorder %s15, 3
      %p158 = pnand %p156, %p157
      %p159 = pneg %p158
      // Predicated region
      $region29: #{tpu_custom_call.1} parent=5 // pred_check
        _
      $region30: #{tpu_custom_call.1} parent=5 // pred_check_branch
        %161 = sbr.rel (%p158) target = $region32
      $region31: #{tpu_custom_call.1} parent=5 // pred_region
        %s162 = ssub.s32 %s15, 1
        %s163 = sand.u32 %s28, 1
        %s164 = scalar_lea.sflag [#allocation3], %s163
        %s165 = sand.u32 %s28, 1
        %s166 = smul.addr %s165, 32
        %s167 = scalar_lea.vmem [#allocation2], %s166
        // Predicated region
        $region33: #{tpu_custom_call.1} parent=31 // pred_check
          %p168 = pneg %p41
        $region34: #{tpu_custom_call.1} parent=31 // pred_check_branch
          %170 = sbr.rel (%p168) target = $region36
        $region35: #{tpu_custom_call.1} parent=31 // pred_region
          %171 = dma.done %s164, 512
        $region36: #{tpu_custom_call.1} parent=31 // pred_fallthru
          _
        %s172 = sand.u32 %s28, 1
        %s173 = scalar_lea.sflag [#allocation3], %s172
        %s174 = sand.u32 %s28, 1
        %s175 = smul.addr %s174, 32
        %s176 = scalar_lea.vmem [#allocation2], %s175
        %p177 = pneg %p41
        %p178 = pneg %p38
        %p179 = pneg %p62
        %p180 = pneg %p59
        %p181 = pneg %p83
        %p182 = pneg %p80
        %p183 = pneg %p109
        %p184 = pneg %p106
        %s185 = sand.u32 %s96, 1
        %s186 = scalar_lea.sflag [#allocation4], %s185
        %s187 = sand.u32 %s96, 1
        %s188 = smul.addr %s187, 32
        %s189 = scalar_lea.vmem [#allocation5], %s188
        %s190 = smul.u32 2, %s20
        %s191 = smul.u32 2, %s20
        %v192 = vld [vmem:[%s1] sm:$0xff]
        %v193 = vld [vmem:[%s2] sm:$0xff]
        %v194 = vlaneseq
        %v195 = vand.u32 %v194, 127
        %v196 = vadd.s32 %v195, 128
        %vm197 = vcmp.lt.s32.totalorder %v195, 0
        %v198 = vsub.s32 0, %v195
        %v199 = vsel %vm197, %v198, %v195
        %v200 = vshrl.u32 %v199, 4
        %v201 = vand.u32 %v199, 15
        %v202 = vsub.s32 0, %v201
        %v203 = vsel %vm197, %v202, %v201
        %vm204 = vcmp.lt.s32.totalorder %v196, 0
        %v205 = vsub.s32 0, %v196
        %v206 = vsel %vm204, %v205, %v196
        %v207 = vshrl.u32 %v206, 4
        %v208 = vand.u32 %v206, 15
        %v209 = vsub.s32 0, %v208
        %v210 = vsel %vm204, %v209, %v208
        %vm211 = vcmp.ne.s32.totalorder %v203, 0
        %vm212 = vcmp.ne.s32.totalorder %v210, 0
        %vm213 = vcmp.lt.s32.totalorder %v203, 0
        %vm214 = vcmp.lt.s32.totalorder %v210, 0
        %vm215 = vmand %vm213, %vm211
        %vm216 = vmand %vm214, %vm212
        %v217 = vadd.s32 %v203, 16
        %v218 = vadd.s32 %v210, 16
        %v219 = vsel %vm215, %v217, %v203
        %v220 = vsel %vm216, %v218, %v210
        %vm221 = vcmp.ne.s32.totalorder %v219, 15
        %vm222 = vcmp.ne.s32.totalorder %v220, 15
        %vm223 = vcmp.ne.s32.totalorder %v219, 0
        %vm224 = vcmp.ne.s32.totalorder %v220, 0
        %v225 = vld [vmem:[%s167] sm:$0xff]
        %v226 = vld [vmem:[%s167 + $0x8] sm:$0xff]
        %v227 = vsel %vm221, %v225, 0.0
        %v228 = vsel %vm222, %v226, 0.0
        %v229 = vsel %vm223, %v225, 0.0
        %v230 = vsel %vm224, %v226, 0.0
        %234 = vrot.lane.b32.xlu0 0.0, 127
        %v235 = vpop.permute.xlu0 %234
        %236 = vrot.lane.b32.xlu0 %v225, 127
        %v237 = vpop.permute.xlu0 %236
        %238 = vrot.lane.b32.xlu0 %v226, 127
        %v239 = vpop.permute.xlu0 %238
        %vm240 = vcmask 1039360
        %v241 = vsel %vm240, %v235, %v237
        %v242 = vsel %vm240, %v237, %v239
        %245 = vrot.lane.b32.xlu0 0.0, 126
        %v246 = vpop.permute.xlu0 %245
        %247 = vrot.lane.b32.xlu0 %v229, 126
        %v248 = vpop.permute.xlu0 %247
        %249 = vrot.lane.b32.xlu0 %v230, 126
        %v250 = vpop.permute.xlu0 %249
        %vm251 = vcmask 1031168
        %v252 = vsel %vm251, %v246, %v248
        %v253 = vsel %vm251, %v248, %v250
        %256 = vrot.lane.b32.xlu0 0.0, 112
        %v257 = vpop.permute.xlu0 %256
        %258 = vrot.lane.b32.xlu0 %v227, 112
        %v259 = vpop.permute.xlu0 %258
        %260 = vrot.lane.b32.xlu0 %v228, 112
        %v261 = vpop.permute.xlu0 %260
        %vm262 = vcmask 916480
        %v263 = vsel %vm262, %v257, %v259
        %v264 = vsel %vm262, %v259, %v261
        %265 = vrot.lane.b32.xlu0 %v225, 111
        %v266 = vpop.permute.xlu0 %265
        %267 = vrot.lane.b32.xlu0 %v226, 111
        %v268 = vpop.permute.xlu0 %267
        %vm269 = vcmask 908288
        %v270 = vsel %vm269, %v266, %v268
        %271 = vrot.lane.b32.xlu0 %v229, 110
        %v272 = vpop.permute.xlu0 %271
        %273 = vrot.lane.b32.xlu0 %v230, 110
        %v274 = vpop.permute.xlu0 %273
        %275 = vrot.lane.b32.xlu0 0.0, 110
        %v276 = vpop.permute.xlu0 %275
        %vm277 = vcmask 900096
        %v278 = vsel %vm277, %v272, %v274
        %v279 = vsel %vm277, %v274, %v276
        %280 = vrot.lane.b32.xlu0 %v227, 96
        %v281 = vpop.permute.xlu0 %280
        %282 = vrot.lane.b32.xlu0 %v228, 96
        %v283 = vpop.permute.xlu0 %282
        %284 = vrot.lane.b32.xlu0 0.0, 96
        %v285 = vpop.permute.xlu0 %284
        %vm286 = vcmask 785408
        %v287 = vsel %vm286, %v281, %v283
        %v288 = vsel %vm286, %v283, %v285
        %289 = vrot.lane.b32.xlu0 %v225, 95
        %v290 = vpop.permute.xlu0 %289
        %291 = vrot.lane.b32.xlu0 %v226, 95
        %v292 = vpop.permute.xlu0 %291
        %293 = vrot.lane.b32.xlu0 0.0, 95
        %v294 = vpop.permute.xlu0 %293
        %vm295 = vcmask 777216
        %v296 = vsel %vm295, %v290, %v292
        %v297 = vsel %vm295, %v292, %v294
        %298 = vrot.lane.b32.xlu0 %v229, 94
        %v299 = vpop.permute.xlu0 %298
        %300 = vrot.lane.b32.xlu0 %v230, 94
        %v301 = vpop.permute.xlu0 %300
        %302 = vrot.lane.b32.xlu0 0.0, 94
        %v303 = vpop.permute.xlu0 %302
        %vm304 = vcmask 769024
        %v305 = vsel %vm304, %v299, %v301
        %v306 = vsel %vm304, %v301, %v303
        %308 = vset.pattern.permute.xlu0 0
        %309 = vperm.xlu0 %308, %v193
        %v310 = vpop.permute.xlu0 %309
        %312 = vrot.lane.b32.xlu0 0.0, 17
        %v313 = vpop.permute.xlu0 %312
        %314 = vrot.lane.b32.xlu0 %v227, 17
        %v315 = vpop.permute.xlu0 %314
        %316 = vrot.lane.b32.xlu0 %v228, 17
        %v317 = vpop.permute.xlu0 %316
        %318 = vrot.lane.b32.xlu0 %v241, 17
        %v319 = vpop.permute.xlu0 %318
        %320 = vrot.lane.b32.xlu0 %v242, 17
        %v321 = vpop.permute.xlu0 %320
        %322 = vrot.lane.b32.xlu0 %v239, 17
        %v323 = vpop.permute.xlu0 %322
        %324 = vrot.lane.b32.xlu0 %v252, 17
        %v325 = vpop.permute.xlu0 %324
        %326 = vrot.lane.b32.xlu0 %v253, 17
        %v327 = vpop.permute.xlu0 %326
        %328 = vrot.lane.b32.xlu0 %v250, 17
        %v329 = vpop.permute.xlu0 %328
        %330 = vrot.lane.b32.xlu0 %v263, 17
        %v331 = vpop.permute.xlu0 %330
        %332 = vrot.lane.b32.xlu0 %v264, 17
        %v333 = vpop.permute.xlu0 %332
        %334 = vrot.lane.b32.xlu0 %v261, 17
        %v335 = vpop.permute.xlu0 %334
        %336 = vrot.lane.b32.xlu0 %v266, 17
        %v337 = vpop.permute.xlu0 %336
        %338 = vrot.lane.b32.xlu0 %v270, 17
        %v339 = vpop.permute.xlu0 %338
        %340 = vrot.lane.b32.xlu0 %v268, 17
        %v341 = vpop.permute.xlu0 %340
        %342 = vrot.lane.b32.xlu0 %v272, 17
        %v343 = vpop.permute.xlu0 %342
        %344 = vrot.lane.b32.xlu0 %v278, 17
        %v345 = vpop.permute.xlu0 %344
        %346 = vrot.lane.b32.xlu0 %v279, 17
        %v347 = vpop.permute.xlu0 %346
        %348 = vrot.lane.b32.xlu0 %v281, 17
        %v349 = vpop.permute.xlu0 %348
        %350 = vrot.lane.b32.xlu0 %v287, 17
        %v351 = vpop.permute.xlu0 %350
        %352 = vrot.lane.b32.xlu0 %v288, 17
        %v353 = vpop.permute.xlu0 %352
        %354 = vrot.lane.b32.xlu0 %v290, 17
        %v355 = vpop.permute.xlu0 %354
        %356 = vrot.lane.b32.xlu0 %v296, 17
        %v357 = vpop.permute.xlu0 %356
        %358 = vrot.lane.b32.xlu0 %v297, 17
        %v359 = vpop.permute.xlu0 %358
        %360 = vrot.lane.b32.xlu0 %v299, 17
        %v361 = vpop.permute.xlu0 %360
        %362 = vrot.lane.b32.xlu0 %v305, 17
        %v363 = vpop.permute.xlu0 %362
        %364 = vrot.lane.b32.xlu0 %v306, 17
        %v365 = vpop.permute.xlu0 %364
        %vm366 = vcmask 138240
        %v367 = vsel %vm366, %v313, %v315
        %v368 = vsel %vm366, %v315, %v317
        %v369 = vsel %vm366, %v319, %v321
        %v370 = vsel %vm366, %v321, %v323
        %v371 = vsel %vm366, %v325, %v327
        %v372 = vsel %vm366, %v327, %v329
        %v373 = vsel %vm366, %v331, %v333
        %v374 = vsel %vm366, %v333, %v335
        %v375 = vsel %vm366, %v337, %v339
        %v376 = vsel %vm366, %v339, %v341
        %v377 = vsel %vm366, %v343, %v345
        %v378 = vsel %vm366, %v345, %v347
        %v379 = vsel %vm366, %v349, %v351
        %v380 = vsel %vm366, %v351, %v353
        %v381 = vsel %vm366, %v355, %v357
        %v382 = vsel %vm366, %v357, %v359
        %v383 = vsel %vm366, %v361, %v363
        %v384 = vsel %vm366, %v363, %v365
        %vm403 = vcmask 588800
        %v405 = vsel %vm403, %v192, 0
        %407 = vmatprep.subr.mxu0 0.0
        %408 = vmatpush1.msra.mxu0 0.0
        %409 = vmatprep.subr.mxu0 0.0
        %410 = vmatpush1.msra.mxu0 0.0
        %411 = vmatprep.subr.mxu0 0.0
        %412 = vmatpush1.msra.mxu0 0.0
        %413 = vmatprep.subr.mxu0 0.0
        %414 = vmatpush1.msra.mxu0 0.0
        %415 = vmatprep.subr.mxu0 0.0
        %416 = vmatpush1.msra.mxu0 0.0
        %417 = vmatprep.subr.mxu0 0.0
        %418 = vmatpush1.msra.mxu0 0.0
        %419 = vmatprep.subr.mxu0 0.0
        %420 = vmatpush1.msra.mxu0 0.0
        %421 = vmatprep.subr.mxu0 %v384
        %422 = vmatpush1.msra.mxu0 %v383
        %423 = vmatprep.subr.mxu0 %v382
        %424 = vmatpush1.msra.mxu0 %v381
        %425 = vmatprep.subr.mxu0 %v380
        %426 = vmatpush1.msra.mxu0 %v379
        %427 = vmatprep.subr.mxu0 %v378
        %428 = vmatpush1.msra.mxu0 %v377
        %429 = vmatprep.subr.mxu0 %v376
        %430 = vmatpush1.msra.mxu0 %v375
        %431 = vmatprep.subr.mxu0 %v374
        %432 = vmatpush1.msra.mxu0 %v373
        %433 = vmatprep.subr.mxu0 %v372
        %434 = vmatpush1.msra.mxu0 %v371
        %435 = vmatprep.subr.mxu0 %v370
        %436 = vmatpush1.msra.mxu0 %v369
        %437 = vmatprep.subr.mxu0 %v368
        %438 = vmatpush1.msra.mxu0 %v367
        %439 = vmatprep.subr.mxu0 0.0
        %440 = vmatpush2.msra.mxu0 0.0
        %441 = vmatprep.subr.mxu0 0.0
        %442 = vmatpush2.msra.mxu0 0.0
        %443 = vmatprep.subr.mxu0 0.0
        %444 = vmatpush2.msra.mxu0 0.0
        %445 = vmatprep.subr.mxu0 0.0
        %446 = vmatpush2.msra.mxu0 0.0
        %447 = vmatprep.subr.mxu0 0.0
        %448 = vmatpush2.msra.mxu0 0.0
        %449 = vmatprep.subr.mxu0 0.0
        %450 = vmatpush2.msra.mxu0 0.0
        %451 = vmatprep.subr.mxu0 0.0
        %452 = vmatpush2.msra.mxu0 0.0
        %453 = vmatprep.subr.mxu0 0.0
        %454 = vmatpush2.msra.mxu0 0.0
        %455 = vmatprep.subr.mxu0 0.0
        %456 = vmatpush2.msra.mxu0 0.0
        %457 = vmatprep.subr.mxu0 0.0
        %458 = vmatpush2.msra.mxu0 0.0
        %459 = vmatprep.subr.mxu0 0.0
        %460 = vmatpush2.msra.mxu0 0.0
        %461 = vmatprep.subr.mxu0 0.0
        %462 = vmatpush2.msra.mxu0 0.0
        %463 = vmatprep.subr.mxu0 0.0
        %464 = vmatpush2.msra.mxu0 0.0
        %465 = vmatprep.subr.mxu0 0.0
        %466 = vmatpush2.msra.mxu0 0.0
        %467 = vmatprep.subr.mxu0 0.0
        %468 = vmatpush2.msra.mxu0 0.0
        %469 = vmatprep.subr.mxu0 0.0
        %470 = vmatpush2.msra.mxu0 0.0
        %471 = vmatprep.mubr.f32.mxu0 0.0
        %472 = vmatmul.mubr.f32.gmra.mxu0 %v405
        %v473 = vpop.f32.mrf.mxu0
        %v474 = vadd.f32 %v310, %v473
        %v475 = vpop.f32.mrf.mxu0
        %v476 = vadd.f32 %v310, %v475
        %477 = vdwg.mxu0
        %478 = vst [vmem:[%s189] sm:$0xff] %v474
        %479 = vst [vmem:[%s189 + $0x8] sm:$0xff] %v476
        %s480 = scalar_lea.vmem %s167, 16 [#allocation2]
        %v481 = vld [vmem:[%s480] sm:$0xff]
        %v482 = vld [vmem:[%s480 + $0x8] sm:$0xff]
        %v483 = vsel %vm221, %v481, 0.0
        %v484 = vsel %vm222, %v482, 0.0
        %v485 = vsel %vm223, %v481, 0.0
        %v486 = vsel %vm224, %v482, 0.0
        %489 = vrot.lane.b32.xlu0 %v481, 127
        %v490 = vpop.permute.xlu0 %489
        %491 = vrot.lane.b32.xlu0 %v482, 127
        %v492 = vpop.permute.xlu0 %491
        %v493 = vsel %vm240, %v235, %v490
        %v494 = vsel %vm240, %v490, %v492
        %497 = vrot.lane.b32.xlu0 %v485, 126
        %v498 = vpop.permute.xlu0 %497
        %499 = vrot.lane.b32.xlu0 %v486, 126
        %v500 = vpop.permute.xlu0 %499
        %v501 = vsel %vm251, %v246, %v498
        %v502 = vsel %vm251, %v498, %v500
        %505 = vrot.lane.b32.xlu0 %v483, 112
        %v506 = vpop.permute.xlu0 %505
        %507 = vrot.lane.b32.xlu0 %v484, 112
        %v508 = vpop.permute.xlu0 %507
        %v509 = vsel %vm262, %v257, %v506
        %v510 = vsel %vm262, %v506, %v508
        %511 = vrot.lane.b32.xlu0 %v481, 111
        %v512 = vpop.permute.xlu0 %511
        %513 = vrot.lane.b32.xlu0 %v482, 111
        %v514 = vpop.permute.xlu0 %513
        %v515 = vsel %vm269, %v512, %v514
        %516 = vrot.lane.b32.xlu0 %v485, 110
        %v517 = vpop.permute.xlu0 %516
        %518 = vrot.lane.b32.xlu0 %v486, 110
        %v519 = vpop.permute.xlu0 %518
        %v520 = vsel %vm277, %v517, %v519
        %v521 = vsel %vm277, %v519, %v276
        %522 = vrot.lane.b32.xlu0 %v483, 96
        %v523 = vpop.permute.xlu0 %522
        %524 = vrot.lane.b32.xlu0 %v484, 96
        %v525 = vpop.permute.xlu0 %524
        %v526 = vsel %vm286, %v523, %v525
        %v527 = vsel %vm286, %v525, %v285
        %528 = vrot.lane.b32.xlu0 %v481, 95
        %v529 = vpop.permute.xlu0 %528
        %530 = vrot.lane.b32.xlu0 %v482, 95
        %v531 = vpop.permute.xlu0 %530
        %v532 = vsel %vm295, %v529, %v531
        %v533 = vsel %vm295, %v531, %v294
        %534 = vrot.lane.b32.xlu0 %v485, 94
        %v535 = vpop.permute.xlu0 %534
        %536 = vrot.lane.b32.xlu0 %v486, 94
        %v537 = vpop.permute.xlu0 %536
        %v538 = vsel %vm304, %v535, %v537
        %v539 = vsel %vm304, %v537, %v303
        %540 = vrot.lane.b32.xlu0 %v483, 17
        %v541 = vpop.permute.xlu0 %540
        %542 = vrot.lane.b32.xlu0 %v484, 17
        %v543 = vpop.permute.xlu0 %542
        %544 = vrot.lane.b32.xlu0 %v493, 17
        %v545 = vpop.permute.xlu0 %544
        %546 = vrot.lane.b32.xlu0 %v494, 17
        %v547 = vpop.permute.xlu0 %546
        %548 = vrot.lane.b32.xlu0 %v492, 17
        %v549 = vpop.permute.xlu0 %548
        %550 = vrot.lane.b32.xlu0 %v501, 17
        %v551 = vpop.permute.xlu0 %550
        %552 = vrot.lane.b32.xlu0 %v502, 17
        %v553 = vpop.permute.xlu0 %552
        %554 = vrot.lane.b32.xlu0 %v500, 17
        %v555 = vpop.permute.xlu0 %554
        %556 = vrot.lane.b32.xlu0 %v509, 17
        %v557 = vpop.permute.xlu0 %556
        %558 = vrot.lane.b32.xlu0 %v510, 17
        %v559 = vpop.permute.xlu0 %558
        %560 = vrot.lane.b32.xlu0 %v508, 17
        %v561 = vpop.permute.xlu0 %560
        %562 = vrot.lane.b32.xlu0 %v512, 17
        %v563 = vpop.permute.xlu0 %562
        %564 = vrot.lane.b32.xlu0 %v515, 17
        %v565 = vpop.permute.xlu0 %564
        %566 = vrot.lane.b32.xlu0 %v514, 17
        %v567 = vpop.permute.xlu0 %566
        %568 = vrot.lane.b32.xlu0 %v517, 17
        %v569 = vpop.permute.xlu0 %568
        %570 = vrot.lane.b32.xlu0 %v520, 17
        %v571 = vpop.permute.xlu0 %570
        %572 = vrot.lane.b32.xlu0 %v521, 17
        %v573 = vpop.permute.xlu0 %572
        %574 = vrot.lane.b32.xlu0 %v523, 17
        %v575 = vpop.permute.xlu0 %574
        %576 = vrot.lane.b32.xlu0 %v526, 17
        %v577 = vpop.permute.xlu0 %576
        %578 = vrot.lane.b32.xlu0 %v527, 17
        %v579 = vpop.permute.xlu0 %578
        %580 = vrot.lane.b32.xlu0 %v529, 17
        %v581 = vpop.permute.xlu0 %580
        %582 = vrot.lane.b32.xlu0 %v532, 17
        %v583 = vpop.permute.xlu0 %582
        %584 = vrot.lane.b32.xlu0 %v533, 17
        %v585 = vpop.permute.xlu0 %584
        %586 = vrot.lane.b32.xlu0 %v535, 17
        %v587 = vpop.permute.xlu0 %586
        %588 = vrot.lane.b32.xlu0 %v538, 17
        %v589 = vpop.permute.xlu0 %588
        %590 = vrot.lane.b32.xlu0 %v539, 17
        %v591 = vpop.permute.xlu0 %590
        %v592 = vsel %vm366, %v313, %v541
        %v593 = vsel %vm366, %v541, %v543
        %v594 = vsel %vm366, %v545, %v547
        %v595 = vsel %vm366, %v547, %v549
        %v596 = vsel %vm366, %v551, %v553
        %v597 = vsel %vm366, %v553, %v555
        %v598 = vsel %vm366, %v557, %v559
        %v599 = vsel %vm366, %v559, %v561
        %v600 = vsel %vm366, %v563, %v565
        %v601 = vsel %vm366, %v565, %v567
        %v602 = vsel %vm366, %v569, %v571
        %v603 = vsel %vm366, %v571, %v573
        %v604 = vsel %vm366, %v575, %v577
        %v605 = vsel %vm366, %v577, %v579
        %v606 = vsel %vm366, %v581, %v583
        %v607 = vsel %vm366, %v583, %v585
        %v608 = vsel %vm366, %v587, %v589
        %v609 = vsel %vm366, %v589, %v591
        %628 = vmatprep.subr.mxu0 0.0
        %629 = vmatpush1.msra.mxu0 0.0
        %630 = vmatprep.subr.mxu0 0.0
        %631 = vmatpush1.msra.mxu0 0.0
        %632 = vmatprep.subr.mxu0 0.0
        %633 = vmatpush1.msra.mxu0 0.0
        %634 = vmatprep.subr.mxu0 0.0
        %635 = vmatpush1.msra.mxu0 0.0
        %636 = vmatprep.subr.mxu0 0.0
        %637 = vmatpush1.msra.mxu0 0.0
        %638 = vmatprep.subr.mxu0 0.0
        %639 = vmatpush1.msra.mxu0 0.0
        %640 = vmatprep.subr.mxu0 0.0
        %641 = vmatpush1.msra.mxu0 0.0
        %642 = vmatprep.subr.mxu0 %v609
        %643 = vmatpush1.msra.mxu0 %v608
        %644 = vmatprep.subr.mxu0 %v607
        %645 = vmatpush1.msra.mxu0 %v606
        %646 = vmatprep.subr.mxu0 %v605
        %647 = vmatpush1.msra.mxu0 %v604
        %648 = vmatprep.subr.mxu0 %v603
        %649 = vmatpush1.msra.mxu0 %v602
        %650 = vmatprep.subr.mxu0 %v601
        %651 = vmatpush1.msra.mxu0 %v600
        %652 = vmatprep.subr.mxu0 %v599
        %653 = vmatpush1.msra.mxu0 %v598
        %654 = vmatprep.subr.mxu0 %v597
        %655 = vmatpush1.msra.mxu0 %v596
        %656 = vmatprep.subr.mxu0 %v595
        %657 = vmatpush1.msra.mxu0 %v594
        %658 = vmatprep.subr.mxu0 %v593
        %659 = vmatpush1.msra.mxu0 %v592
        %660 = vmatprep.subr.mxu0 0.0
        %661 = vmatpush2.msra.mxu0 0.0
        %662 = vmatprep.subr.mxu0 0.0
        %663 = vmatpush2.msra.mxu0 0.0
        %664 = vmatprep.subr.mxu0 0.0
        %665 = vmatpush2.msra.mxu0 0.0
        %666 = vmatprep.subr.mxu0 0.0
        %667 = vmatpush2.msra.mxu0 0.0
        %668 = vmatprep.subr.mxu0 0.0
        %669 = vmatpush2.msra.mxu0 0.0
        %670 = vmatprep.subr.mxu0 0.0
        %671 = vmatpush2.msra.mxu0 0.0
        %672 = vmatprep.subr.mxu0 0.0
        %673 = vmatpush2.msra.mxu0 0.0
        %674 = vmatprep.subr.mxu0 0.0
        %675 = vmatpush2.msra.mxu0 0.0
        %676 = vmatprep.subr.mxu0 0.0
        %677 = vmatpush2.msra.mxu0 0.0
        %678 = vmatprep.subr.mxu0 0.0
        %679 = vmatpush2.msra.mxu0 0.0
        %680 = vmatprep.subr.mxu0 0.0
        %681 = vmatpush2.msra.mxu0 0.0
        %682 = vmatprep.subr.mxu0 0.0
        %683 = vmatpush2.msra.mxu0 0.0
        %684 = vmatprep.subr.mxu0 0.0
        %685 = vmatpush2.msra.mxu0 0.0
        %686 = vmatprep.subr.mxu0 0.0
        %687 = vmatpush2.msra.mxu0 0.0
        %688 = vmatprep.subr.mxu0 0.0
        %689 = vmatpush2.msra.mxu0 0.0
        %690 = vmatprep.subr.mxu0 0.0
        %691 = vmatpush2.msra.mxu0 0.0
        %692 = vmatprep.mubr.f32.mxu0 0.0
        %693 = vmatmul.mubr.f32.gmra.mxu0 %v405
        %v694 = vpop.f32.mrf.mxu0
        %v695 = vadd.f32 %v310, %v694
        %v696 = vpop.f32.mrf.mxu0
        %v697 = vadd.f32 %v310, %v696
        %698 = vdwg.mxu0
        %s699 = scalar_lea.vmem %s189, 16 [#allocation5]
        %700 = vst [vmem:[%s699] sm:$0xff] %v695
        %701 = vst [vmem:[%s699 + $0x8] sm:$0xff] %v697
        %s702 = sand.u32 %s96, 1
        %s703 = scalar_lea.sflag [#allocation4], %s702
        %s704 = sand.u32 %s96, 1
        %s705 = smul.addr %s704, 32
        %s706 = scalar_lea.vmem [#allocation5], %s705
        // Predicated region
        $region37: #{tpu_custom_call.1} parent=31 // pred_check
          %p707 = pneg %p106
        $region38: #{tpu_custom_call.1} parent=31 // pred_check_branch
          %709 = sbr.rel (%p707) target = $region40
        $region39: #{tpu_custom_call.1} parent=31 // pred_region
          %s710 = smul.u32 2, %s20
          %s712 = ssub.s32 512, 512
          %713 = vsyncadd %s703, %s712
          %s714 = smul.addr %s710, 2
          %s715 = smul.addr %s714, 128
          %s716 = scalar_lea.hbm %s3, %s715
          %s717 = sshll.u32 %s706, 4
          %s718 = int_to_ptr.vmem [resolvable:$true] %s717
          %723 = dma.vmem_to_hbm [thread:$0]  %s718, 512, %s716, %s703, 256, 256, 16
        $region40: #{tpu_custom_call.1} parent=31 // pred_fallthru
          _
      $region32: #{tpu_custom_call.1} parent=5 // pred_fallthru
        _
      %p724 = scmp.le.s32.totalorder 2, %s15
      // Predicated region
      $region41: #{tpu_custom_call.1} parent=5 // pred_check
        %p725 = pneg %p724
      $region42: #{tpu_custom_call.1} parent=5 // pred_check_branch
        %727 = sbr.rel (%p725) target = $region44
      $region43: #{tpu_custom_call.1} parent=5 // pred_region
        %s728 = ssub.s32 %s15, 2
        // Predicated region
        $region45: #{tpu_custom_call.1} parent=43 // pred_check
          %p729 = pneg %p112
        $region46: #{tpu_custom_call.1} parent=43 // pred_check_branch
          %731 = sbr.rel (%p729) target = $region48
        $region47: #{tpu_custom_call.1} parent=43 // pred_region
          %s732 = sand.u32 %s97, 1
          %s733 = scalar_lea.sflag [#allocation4], %s732
          %s734 = sand.u32 %s97, 1
          %s735 = smul.addr %s734, 32
          %s736 = scalar_lea.vmem [#allocation5], %s735
          %737 = dma.done %s733, 512
        $region48: #{tpu_custom_call.1} parent=43 // pred_fallthru
          _
      $region44: #{tpu_custom_call.1} parent=5 // pred_fallthru
        _
    $region6: #{tpu_custom_call.1} parent=1 // loop_footer
      %s19 = sadd.s32 1, %s15
    $region7: #{tpu_custom_call.1} parent=1 // loop_footer_branch
      %14 = sbr.rel target = $region3
    $region8: #{tpu_custom_call.1} parent=1 // loop_exit
      _
    %738 = vsyncpa [#allocation3], 1
    %s739 = scalar_lea.sflag [#allocation3], 1
    %740 = vsyncpa %s739, 1
    %741 = vsyncpa [#allocation4], 1
    %s742 = scalar_lea.sflag [#allocation4], 1
    %743 = vsyncpa %s742, 1

</llo_original>
